<compile_context>
chip_gen: v6e
topology: v6e:2x2x1
jax: 0.10.0
libtpu: 0.0.40
codegen_flags: <defaults>
</compile_context>

<pallas_src>
import functools

import jax
import jax.numpy as jnp
from jax import lax
from jax.experimental import pallas as pl
from jax.experimental.pallas import tpu as pltpu


_LANE = 128
_SUBLANE = 8
_TILE_B_MAX = 4096          # rows per grid step (VMEM-safe on v5e/v6e/v7x)
_MAX_PAD_FRAC = 0.125       # max tolerated padded-row fraction


def _round_up(x, m):
    return ((x + m - 1) // m) * m


# --------------------------------------------------------------------------- #
# Kernel
# --------------------------------------------------------------------------- #
def _encoder_kernel(x_ref, w1_ref, b1_ref, w2_ref, b2_ref, wh_ref, bh_ref,
                    out_ref, *, z_half):
    # x tile: (tile_b, input_dim) bf16. All dots accumulate in f32 on the MXU.
    x = x_ref[...]

    # hidden layer 1: Linear + ReLU (bias add / ReLU in f32)
    h1 = jnp.dot(x, w1_ref[...], preferred_element_type=jnp.float32)
    h1 = jnp.maximum(h1 + b1_ref[...], 0.0)

    # hidden layer 2: Linear + ReLU
    h2 = jnp.dot(h1.astype(jnp.bfloat16), w2_ref[...],
                 preferred_element_type=jnp.float32)
    h2 = jnp.maximum(h2 + b2_ref[...], 0.0)

    # fused mean/cov head: one lane-dense (tile_b, 2*z_half) matmul
    zh = jnp.dot(h2.astype(jnp.bfloat16), wh_ref[...],
                 preferred_element_type=jnp.float32)
    zh = zh + bh_ref[...]

    # columns [z_half, 2*z_half) are the cov head -> exp; the rest is the mean
    # head.  exp over the full slab is EUP-slot filler (free while mem-bound).
    col = lax.broadcasted_iota(jnp.int32, zh.shape, 1)
    out = jnp.where(col >= z_half, jnp.exp(zh), zh)
    out_ref[...] = out.astype(out_ref.dtype)


# --------------------------------------------------------------------------- #
# One-time parameter packing (hoisted out of the per-call path)
# --------------------------------------------------------------------------- #
def pack_encoder_params(params):
    """Pack/cast weights once: bf16 matmul operands + fused lane-padded head."""
    input_dim, hidden_dim = params["w1"].shape
    z_dim = params["wm"].shape[1]
    z_half = _round_up(z_dim, _LANE // 2)       # 64-lane half -> 128-lane head
    head_w = 2 * z_half
    bf16, f32 = jnp.bfloat16, jnp.float32

    whead = jnp.zeros((hidden_dim, head_w), bf16)
    whead = whead.at[:, :z_dim].set(params["wm"].astype(bf16))
    whead = whead.at[:, z_half:z_half + z_dim].set(params["wc"].astype(bf16))
    bhead = jnp.zeros((1, head_w), f32)
    bhead = bhead.at[:, :z_dim].set(params["bm"].astype(f32))
    bhead = bhead.at[:, z_half:z_half + z_dim].set(params["bc"].astype(f32))

    return {
        "w1": params["w1"].astype(bf16), "b1": params["b1"].astype(f32),
        "w2": params["w2"].astype(bf16), "b2": params["b2"].astype(f32),
        "whead": whead, "bhead": bhead,
        # static metadata (plain Python ints)
        "input_dim": input_dim, "hidden_dim": hidden_dim,
        "z_dim": z_dim, "z_half": z_half,
    }


# --------------------------------------------------------------------------- #
# Batch tiling policy
# --------------------------------------------------------------------------- #
def _pick_batch_tiling(b_flat):
    """Pick (tile_b, b_pad): biggest tile <= _TILE_B_MAX with bounded padding
    waste, then ensure >=2 grid steps so v7x's two TensorCores both get work."""
    aligned = _round_up(b_flat, _SUBLANE)
    tile = min(_TILE_B_MAX, aligned)
    while tile > _SUBLANE:
        waste = _round_up(b_flat, tile) - b_flat
        if waste <= max(int(_MAX_PAD_FRAC * b_flat), _SUBLANE - 1):
            break
        tile = max(_SUBLANE, _round_up(tile // 2, _SUBLANE))
    b_pad = _round_up(b_flat, tile)
    if b_pad // tile < 2 and tile >= 2 * _SUBLANE:
        tile = _round_up(pl.cdiv(b_pad, 2), _SUBLANE)
        b_pad = _round_up(b_flat, tile)
    return tile, b_pad


# --------------------------------------------------------------------------- #
# Forward wrapper
# --------------------------------------------------------------------------- #
def encoder_forward(x, packed):
    """VAE-encoder forward as a single batch-tiled Pallas kernel.

    Returns (z_loc, z_scale), each of shape (b_flat, z_dim), dtype float32.
    """
    input_dim = packed["input_dim"]
    hidden_dim = packed["hidden_dim"]
    z_dim = packed["z_dim"]
    z_half = packed["z_half"]
    head_w = 2 * z_half

    x2d = x.reshape(-1, input_dim)
    b_flat = x2d.shape[0]
    tile_b, b_pad = _pick_batch_tiling(b_flat)
    grid = (b_pad // tile_b,)

    bf16 = jnp.bfloat16
    if b_pad == b_flat:
        # no materialized zero-pad pass when the batch is already tile-aligned
        x_p = x2d if x2d.dtype == bf16 else x2d.astype(bf16)
    else:
        x_p = jnp.zeros((b_pad, input_dim), bf16).at[:b_flat].set(
            x2d.astype(bf16))

    resident = lambda a: pl.BlockSpec(a.shape, lambda i: (0, 0))

    flops = 2 * b_pad * (input_dim * hidden_dim
                         + hidden_dim * hidden_dim
                         + hidden_dim * head_w)
    bytes_accessed = (x_p.size * 2
                      + packed["w1"].size * 2 + packed["w2"].size * 2
                      + packed["whead"].size * 2
                      + packed["b1"].size * 4 + packed["b2"].size * 4
                      + packed["bhead"].size * 4
                      + b_pad * head_w * 2)                 # bf16 output slab

    out = pl.pallas_call(
        functools.partial(_encoder_kernel, z_half=z_half),
        out_shape=jax.ShapeDtypeStruct((b_pad, head_w), bf16),
        grid=grid,
        in_specs=[
            pl.BlockSpec((tile_b, input_dim), lambda i: (i, 0)),   # streamed x
            resident(packed["w1"]), resident(packed["b1"]),        # resident
            resident(packed["w2"]), resident(packed["b2"]),
            resident(packed["whead"]), resident(packed["bhead"]),
        ],
        out_specs=pl.BlockSpec((tile_b, head_w), lambda i: (i, 0)),
        compiler_params=pltpu.CompilerParams(
            dimension_semantics=("parallel",),
            vmem_limit_bytes=32 * 1024 * 1024),
        cost_estimate=pl.CostEstimate(
            flops=flops,
            transcendentals=b_pad * head_w,
            bytes_accessed=bytes_accessed),
    )(x_p, packed["w1"], packed["b1"], packed["w2"], packed["b2"],
      packed["whead"], packed["bhead"])

    z_loc = out[:b_flat, :z_dim].astype(jnp.float32)
    z_scale = out[:b_flat, z_half:z_half + z_dim].astype(jnp.float32)
    return z_loc, z_scale


# --------------------------------------------------------------------------- #
# Parameters / references / test
# --------------------------------------------------------------------------- #
def init_encoder_params(key, input_dim, z_dim, hidden_dim):
    """Synthetic parameters; weights stored (in, out) = transposed nn.Linear."""
    ks = jax.random.split(key, 8)
    scale = 0.05
    return {
        "w1": scale * jax.random.normal(ks[0], (input_dim, hidden_dim), jnp.float32),
        "b1": scale * jax.random.normal(ks[1], (1, hidden_dim), jnp.float32),
        "w2": scale * jax.random.normal(ks[2], (hidden_dim, hidden_dim), jnp.float32),
        "b2": scale * jax.random.normal(ks[3], (1, hidden_dim), jnp.float32),
        "wm": scale * jax.random.normal(ks[4], (hidden_dim, z_dim), jnp.float32),
        "bm": scale * jax.random.normal(ks[5], (1, z_dim), jnp.float32),
        "wc": scale * jax.random.normal(ks[6], (hidden_dim, z_dim), jnp.float32),
        "bc": scale * jax.random.normal(ks[7], (1, z_dim), jnp.float32),
    }


def _reference_forward_f32(x, params, input_dim):
    """Pure-f32 reference (exact PyTorch-module semantics)."""
    x2d = x.reshape(-1, input_dim).astype(jnp.float32)
    h = jnp.maximum(x2d @ params["w1"] + params["b1"], 0.0)
    h = jnp.maximum(h @ params["w2"] + params["b2"], 0.0)
    z_loc = h @ params["wm"] + params["bm"]
    z_scale = jnp.exp(h @ params["wc"] + params["bc"])
    return z_loc, z_scale


def _reference_forward_bf16(x, params, input_dim):
    """Reference replicating the kernel's bf16-matmul / f32-accumulate path,
    including the bf16 rounding of the stored output."""
    bf16 = jnp.bfloat16
    x2d = x.reshape(-1, input_dim).astype(jnp.float32)
    h = jnp.dot(x2d.astype(bf16), params["w1"].astype(bf16),
                preferred_element_type=jnp.float32) + params["b1"]
    h = jnp.maximum(h, 0.0)
    h = jnp.dot(h.astype(bf16), params["w2"].astype(bf16),
                preferred_element_type=jnp.float32) + params["b2"]
    h = jnp.maximum(h, 0.0)
    z_loc = jnp.dot(h.astype(bf16), params["wm"].astype(bf16),
                    preferred_element_type=jnp.float32) + params["bm"]
    z_scale = jnp.exp(jnp.dot(h.astype(bf16), params["wc"].astype(bf16),
                              preferred_element_type=jnp.float32) + params["bc"])
    return (z_loc.astype(bf16).astype(jnp.float32),
            z_scale.astype(bf16).astype(jnp.float32))


def _check(x, params, packed, input_dim, z_dim):
    z_loc, z_scale = encoder_forward(x, packed)
    jax.block_until_ready((z_loc, z_scale))
    b_flat = x.reshape(-1, input_dim).shape[0]
    assert z_loc.shape == (b_flat, z_dim) and z_scale.shape == (b_flat, z_dim)

    # Tight check against a reference using the same bf16/f32 mixed precision
    # (incl. bf16 output rounding).
    ref_loc, ref_scale = _reference_forward_bf16(x, params, input_dim)
    assert jnp.allclose(z_loc, ref_loc, atol=1e-2, rtol=1e-2)
    assert jnp.allclose(z_scale, ref_scale, atol=1e-2, rtol=1e-2)

    # Loose sanity check against the exact f32 module semantics.
    f32_loc, f32_scale = _reference_forward_f32(x, params, input_dim)
    assert jnp.allclose(z_loc, f32_loc, atol=5e-2, rtol=5e-2)
    assert jnp.allclose(z_scale, f32_scale, atol=5e-2, rtol=5e-2)


if __name__ == "__main__":
    input_dim = 16
    z_dim = 8
    hidden_dim = 32

    key = jax.random.PRNGKey(0)
    kx, kx2, kp = jax.random.split(key, 3)

    params = init_encoder_params(kp, input_dim, z_dim, hidden_dim)
    packed = pack_encoder_params(params)   # one-time weight packing

    # Example input: (batch=2, channels=4, feature=16) -> reshape(-1, 16) = (8, 16)
    x = jax.random.normal(kx, (2, 4, input_dim), jnp.float32)
    _check(x, params, packed, input_dim, z_dim)

    # Second small case exercising the multi-step grid + ragged padding path
    # (b_flat=200 -> tile=104, b_pad=208, grid=2).
    x2 = jax.random.normal(kx2, (40, 5, input_dim), jnp.float32)
    _check(x2, params, packed, input_dim, z_dim)

    print("KERNEL_OK")
</pallas_src>

<mosaic_0001>
module attributes {stable_mosaic.version = 11 : i64} {
  func.func @_encoder_kernel(%arg0: i32, %arg1: memref<8x16xbf16, #tpu.memory_space<vmem>>, %arg2: memref<16x32xbf16, #tpu.memory_space<vmem>>, %arg3: memref<1x32xf32, #tpu.memory_space<vmem>>, %arg4: memref<32x32xbf16, #tpu.memory_space<vmem>>, %arg5: memref<1x32xf32, #tpu.memory_space<vmem>>, %arg6: memref<32x128xbf16, #tpu.memory_space<vmem>>, %arg7: memref<1x128xf32, #tpu.memory_space<vmem>>, %arg8: memref<8x128xbf16, #tpu.memory_space<vmem>>) attributes {dimension_semantics = [#tpu.dimension_semantics<parallel>], iteration_bounds = array<i64: 1>, scalar_prefetch = 0 : i64, scratch_operands = 0 : i64, tpu.core_type = #tpu.core_type<tc>, window_params = [{transform_indices = @transform_0, window_bounds = array<i64: 8, 16>}, {pipeline_mode = #tpu.pipeline_mode<synchronous>, transform_indices = @transform_1, window_bounds = array<i64: 16, 32>}, {pipeline_mode = #tpu.pipeline_mode<synchronous>, transform_indices = @transform_2, window_bounds = array<i64: 1, 32>}, {pipeline_mode = #tpu.pipeline_mode<synchronous>, transform_indices = @transform_3, window_bounds = array<i64: 32, 32>}, {pipeline_mode = #tpu.pipeline_mode<synchronous>, transform_indices = @transform_4, window_bounds = array<i64: 1, 32>}, {pipeline_mode = #tpu.pipeline_mode<synchronous>, transform_indices = @transform_5, window_bounds = array<i64: 32, 128>}, {pipeline_mode = #tpu.pipeline_mode<synchronous>, transform_indices = @transform_6, window_bounds = array<i64: 1, 128>}, {transform_indices = @transform_7, window_bounds = array<i64: 8, 128>}]} {
    %c0 = arith.constant 0 : index
    %c0_0 = arith.constant 0 : index
    %0 = vector.load %arg1[%c0, %c0_0] : memref<8x16xbf16, #tpu.memory_space<vmem>>, vector<8x16xbf16>
    %c0_1 = arith.constant 0 : index
    %c0_2 = arith.constant 0 : index
    %1 = vector.load %arg2[%c0_1, %c0_2] : memref<16x32xbf16, #tpu.memory_space<vmem>>, vector<16x32xbf16>
    %cst = arith.constant dense<0.000000e+00> : vector<8x32xf32>
    %2 = tpu.matmul %0, %1, %cst {dimension_numbers = #tpu.dot_dimension_numbers<[1], [0], [0], [1], [0, 0, 1, 1], [], []>} : vector<8x16xbf16>, vector<16x32xbf16>, vector<8x32xf32> -> vector<8x32xf32>
    %c0_3 = arith.constant 0 : index
    %c0_4 = arith.constant 0 : index
    %3 = vector.load %arg3[%c0_3, %c0_4] : memref<1x32xf32, #tpu.memory_space<vmem>>, vector<1x32xf32>
    %4 = vector.broadcast %3 : vector<1x32xf32> to vector<8x32xf32>
    %5 = arith.addf %2, %4 : vector<8x32xf32>
    %cst_5 = arith.constant 0.000000e+00 : f32
    %6 = vector.broadcast %cst_5 : f32 to vector<8x32xf32>
    %7 = arith.maximumf %5, %6 : vector<8x32xf32>
    %8 = arith.truncf %7 : vector<8x32xf32> to vector<8x32xbf16>
    %c0_6 = arith.constant 0 : index
    %c0_7 = arith.constant 0 : index
    %9 = vector.load %arg4[%c0_6, %c0_7] : memref<32x32xbf16, #tpu.memory_space<vmem>>, vector<32x32xbf16>
    %cst_8 = arith.constant dense<0.000000e+00> : vector<8x32xf32>
    %10 = tpu.matmul %8, %9, %cst_8 {dimension_numbers = #tpu.dot_dimension_numbers<[1], [0], [0], [1], [0, 0, 1, 1], [], []>} : vector<8x32xbf16>, vector<32x32xbf16>, vector<8x32xf32> -> vector<8x32xf32>
    %c0_9 = arith.constant 0 : index
    %c0_10 = arith.constant 0 : index
    %11 = vector.load %arg5[%c0_9, %c0_10] : memref<1x32xf32, #tpu.memory_space<vmem>>, vector<1x32xf32>
    %12 = vector.broadcast %11 : vector<1x32xf32> to vector<8x32xf32>
    %13 = arith.addf %10, %12 : vector<8x32xf32>
    %cst_11 = arith.constant 0.000000e+00 : f32
    %14 = vector.broadcast %cst_11 : f32 to vector<8x32xf32>
    %15 = arith.maximumf %13, %14 : vector<8x32xf32>
    %16 = arith.truncf %15 : vector<8x32xf32> to vector<8x32xbf16>
    %c0_12 = arith.constant 0 : index
    %c0_13 = arith.constant 0 : index
    %17 = vector.load %arg6[%c0_12, %c0_13] : memref<32x128xbf16, #tpu.memory_space<vmem>>, vector<32x128xbf16>
    %cst_14 = arith.constant dense<0.000000e+00> : vector<8x128xf32>
    %18 = tpu.matmul %16, %17, %cst_14 {dimension_numbers = #tpu.dot_dimension_numbers<[1], [0], [0], [1], [0, 0, 1, 1], [], []>} : vector<8x32xbf16>, vector<32x128xbf16>, vector<8x128xf32> -> vector<8x128xf32>
    %c0_15 = arith.constant 0 : index
    %c0_16 = arith.constant 0 : index
    %19 = vector.load %arg7[%c0_15, %c0_16] : memref<1x128xf32, #tpu.memory_space<vmem>>, vector<1x128xf32>
    %20 = vector.broadcast %19 : vector<1x128xf32> to vector<8x128xf32>
    %21 = arith.addf %18, %20 : vector<8x128xf32>
    %22 = tpu.iota {dimensions = array<i32: 1>} : vector<8x128xi32>
    %c64_i32 = arith.constant 64 : i32
    %23 = vector.broadcast %c64_i32 : i32 to vector<8x128xi32>
    %24 = arith.cmpi sge, %22, %23 : vector<8x128xi32>
    %25 = math.exp %21 : vector<8x128xf32>
    %26 = arith.select %24, %25, %21 : vector<8x128xi1>, vector<8x128xf32>
    %27 = arith.truncf %26 : vector<8x128xf32> to vector<8x128xbf16>
    %c0_17 = arith.constant 0 : index
    %c0_18 = arith.constant 0 : index
    %28 = vector.load %arg8[%c0_17, %c0_18] : memref<8x128xbf16, #tpu.memory_space<vmem>>, vector<8x128xbf16>
    tpu.vector_store %arg8[%c0_17, %c0_18], %27 {strides = array<i32>} : memref<8x128xbf16, #tpu.memory_space<vmem>>, vector<8x128xbf16>,
    return
  }
  func.func @transform_0(%arg0: i32) -> (i32, i32) {
    %c0_i32 = arith.constant 0 : i32
    %c0_i32_0 = arith.constant 0 : i32
    return %arg0, %c0_i32 : i32, i32
  }
  func.func @transform_1(%arg0: i32) -> (i32, i32) {
    %c0_i32 = arith.constant 0 : i32
    %c0_i32_0 = arith.constant 0 : i32
    %c0_i32_1 = arith.constant 0 : i32
    return %c0_i32, %c0_i32_0 : i32, i32
  }
  func.func @transform_2(%arg0: i32) -> (i32, i32) {
    %c0_i32 = arith.constant 0 : i32
    %c0_i32_0 = arith.constant 0 : i32
    %c0_i32_1 = arith.constant 0 : i32
    return %c0_i32, %c0_i32_0 : i32, i32
  }
  func.func @transform_3(%arg0: i32) -> (i32, i32) {
    %c0_i32 = arith.constant 0 : i32
    %c0_i32_0 = arith.constant 0 : i32
    %c0_i32_1 = arith.constant 0 : i32
    return %c0_i32, %c0_i32_0 : i32, i32
  }
  func.func @transform_4(%arg0: i32) -> (i32, i32) {
    %c0_i32 = arith.constant 0 : i32
    %c0_i32_0 = arith.constant 0 : i32
    %c0_i32_1 = arith.constant 0 : i32
    return %c0_i32, %c0_i32_0 : i32, i32
  }
  func.func @transform_5(%arg0: i32) -> (i32, i32) {
    %c0_i32 = arith.constant 0 : i32
    %c0_i32_0 = arith.constant 0 : i32
    %c0_i32_1 = arith.constant 0 : i32
    return %c0_i32, %c0_i32_0 : i32, i32
  }
  func.func @transform_6(%arg0: i32) -> (i32, i32) {
    %c0_i32 = arith.constant 0 : i32
    %c0_i32_0 = arith.constant 0 : i32
    %c0_i32_1 = arith.constant 0 : i32
    return %c0_i32, %c0_i32_0 : i32, i32
  }
  func.func @transform_7(%arg0: i32) -> (i32, i32) {
    %c0_i32 = arith.constant 0 : i32
    %c0_i32_0 = arith.constant 0 : i32
    return %arg0, %c0_i32 : i32, i32
  }
}

</mosaic_0001>

<llo_original>
// kernel: tpu_custom_call.1
$region0: #{tpu_custom_call.1}
  #allocation0 [shape = 'u32[]', space=smem, size = 0x4, offset = 0x4, fixed_abs, tag = 'smem constant byte address 0x4 - core index']
  #allocation1 [shape = 'u32[144,128]{1,0:T(1,128)}', space=vmem, size = 0x12000, scoped, tag = 'internal scratch']
  %s0 = inlined_call_operand.hbm [shape: bf16[8,16], index: 0, kind: input, shape index: {}]
  %s1 = inlined_call_operand.hbm [shape: bf16[16,32], index: 1, kind: input, shape index: {}]
  %s2 = inlined_call_operand.vmem [shape: f32[1,32], index: 2, kind: input, shape index: {}]
  %s3 = inlined_call_operand.hbm [shape: bf16[32,32], index: 3, kind: input, shape index: {}]
  %s4 = inlined_call_operand.vmem [shape: f32[1,32], index: 4, kind: input, shape index: {}]
  %s5 = inlined_call_operand.hbm [shape: bf16[32,128], index: 5, kind: input, shape index: {}]
  %s6 = inlined_call_operand.vmem [shape: f32[1,128], index: 6, kind: input, shape index: {}]
  %s7 = inlined_call_operand.hbm [shape: bf16[8,128], index: 7, kind: output, shape index: {}]
  %s8 = sld [smem:[#allocation0]]
  $region54: #{tpu_custom_call.1} parent=0
    _
  %s10 = ssub.s32 1, %s8
  %s11 = scalar_select 0, %s10, %s8
  $region1: #{tpu_custom_call.1} parent=0
    #allocation2 [shape = 'u8[2048]{0}', space=vmem, size = 0x800, scoped, tag = 'input window, operand 0, single buffered']
    #allocation3 [shape = 's32[1]{0}', space=sflag, size = 0x4, scoped, tag = 'scoped memory for tpu_custom_call.1']
    #allocation4 [shape = 's32[1]{0}', space=sflag, size = 0x4, scoped, tag = 'scoped memory for tpu_custom_call.1']
    #allocation5 [shape = 'u8[4096]{0}', space=vmem, size = 0x1000, scoped, tag = 'input window, operand 1, single buffered']
    #allocation6 [shape = 's32[1]{0}', space=sflag, size = 0x4, scoped, tag = 'scoped memory for tpu_custom_call.1']
    #allocation7 [shape = 'u8[8192]{0}', space=vmem, size = 0x2000, scoped, tag = 'input window, operand 3, single buffered']
    #allocation8 [shape = 'u8[8192]{0}', space=vmem, size = 0x2000, scoped, tag = 'input window, operand 5, single buffered']
    #allocation9 [shape = 's32[1]{0}', space=sflag, size = 0x4, scoped, tag = 'scoped memory for tpu_custom_call.1']
    #allocation10 [shape = 'u8[2048]{0}', space=vmem, size = 0x800, scoped, tag = 'output window, operand 0, single buffered']
    %12 = vsyncpa [#allocation3], 0
    %13 = vsyncpa [#allocation6], 0
    %14 = vsyncpa [#allocation9], 0
    %15 = vsyncpa [#allocation4], 0
    // Predicated region
    $region2: #{tpu_custom_call.1} parent=1 // pred_check
      _
    $region3: #{tpu_custom_call.1} parent=1 // pred_check_branch
      %17 = sbr.rel (0) target = $region5
    $region4: #{tpu_custom_call.1} parent=1 // pred_region
      %s19 = ssub.s32 64, 64
      %20 = vsyncadd [#allocation3], %s19
      %s22 = sshll.u32 [#allocation2], 4
      %s23 = int_to_ptr.vmem [resolvable:$true] %s22
      %25 = dma.hbm_to_vmem [thread:$0]  %s0, 64, %s23, [#allocation3]
    $region5: #{tpu_custom_call.1} parent=1 // pred_fallthru
      _
    // Predicated region
    $region6: #{tpu_custom_call.1} parent=1 // pred_check
      _
    $region7: #{tpu_custom_call.1} parent=1 // pred_check_branch
      %27 = sbr.rel (0) target = $region9
    $region8: #{tpu_custom_call.1} parent=1 // pred_region
      %s29 = ssub.s32 128, 128
      %30 = vsyncadd [#allocation6], %s29
      %s31 = sshll.u32 [#allocation5], 4
      %s32 = int_to_ptr.vmem [resolvable:$true] %s31
      %37 = dma.hbm_to_vmem [thread:$0]  %s1, 128, %s32, [#allocation6], 64, 64, 4
    $region9: #{tpu_custom_call.1} parent=1 // pred_fallthru
      _
    // Predicated region
    $region10: #{tpu_custom_call.1} parent=1 // pred_check
      _
    $region11: #{tpu_custom_call.1} parent=1 // pred_check_branch
      %39 = sbr.rel (0) target = $region13
    $region12: #{tpu_custom_call.1} parent=1 // pred_region
      _
    $region13: #{tpu_custom_call.1} parent=1 // pred_fallthru
      _
    // Predicated region
    $region14: #{tpu_custom_call.1} parent=1 // pred_check
      _
    $region15: #{tpu_custom_call.1} parent=1 // pred_check_branch
      %41 = sbr.rel (0) target = $region17
    $region16: #{tpu_custom_call.1} parent=1 // pred_region
      %s43 = ssub.s32 256, 256
      %44 = vsyncadd [#allocation6], %s43
      %s45 = sshll.u32 [#allocation7], 4
      %s46 = int_to_ptr.vmem [resolvable:$true] %s45
      %51 = dma.hbm_to_vmem [thread:$0]  %s3, 256, %s46, [#allocation6], 64, 64, 4
    $region17: #{tpu_custom_call.1} parent=1 // pred_fallthru
      _
    // Predicated region
    $region18: #{tpu_custom_call.1} parent=1 // pred_check
      _
    $region19: #{tpu_custom_call.1} parent=1 // pred_check_branch
      %53 = sbr.rel (0) target = $region21
    $region20: #{tpu_custom_call.1} parent=1 // pred_region
      _
    $region21: #{tpu_custom_call.1} parent=1 // pred_fallthru
      _
    // Predicated region
    $region22: #{tpu_custom_call.1} parent=1 // pred_check
      _
    $region23: #{tpu_custom_call.1} parent=1 // pred_check_branch
      %55 = sbr.rel (0) target = $region25
    $region24: #{tpu_custom_call.1} parent=1 // pred_region
      %s57 = ssub.s32 256, 256
      %58 = vsyncadd [#allocation9], %s57
      %s59 = sshll.u32 [#allocation8], 4
      %s60 = int_to_ptr.vmem [resolvable:$true] %s59
      %65 = dma.hbm_to_vmem [thread:$0]  %s5, 256, %s60, [#allocation9], 64, 64, 4
    $region25: #{tpu_custom_call.1} parent=1 // pred_fallthru
      _
    // Predicated region
    $region26: #{tpu_custom_call.1} parent=1 // pred_check
      _
    $region27: #{tpu_custom_call.1} parent=1 // pred_check_branch
      %67 = sbr.rel (0) target = $region29
    $region28: #{tpu_custom_call.1} parent=1 // pred_region
      _
    $region29: #{tpu_custom_call.1} parent=1 // pred_fallthru
      _
    // Predicated region
    $region30: #{tpu_custom_call.1} parent=1 // pred_check
      _
    $region31: #{tpu_custom_call.1} parent=1 // pred_check_branch
      %69 = sbr.rel (0) target = $region33
    $region32: #{tpu_custom_call.1} parent=1 // pred_region
      %70 = dma.done [#allocation3], 64
    $region33: #{tpu_custom_call.1} parent=1 // pred_fallthru
      _
    // Predicated region
    $region34: #{tpu_custom_call.1} parent=1 // pred_check
      _
    $region35: #{tpu_custom_call.1} parent=1 // pred_check_branch
      %72 = sbr.rel (0) target = $region37
    $region36: #{tpu_custom_call.1} parent=1 // pred_region
      %73 = dma.done [#allocation6], 128
    $region37: #{tpu_custom_call.1} parent=1 // pred_fallthru
      _
    // Predicated region
    $region38: #{tpu_custom_call.1} parent=1 // pred_check
      _
    $region39: #{tpu_custom_call.1} parent=1 // pred_check_branch
      %75 = sbr.rel (0) target = $region41
    $region40: #{tpu_custom_call.1} parent=1 // pred_region
      %76 = dma.done [#allocation6], 256
    $region41: #{tpu_custom_call.1} parent=1 // pred_fallthru
      _
    // Predicated region
    $region42: #{tpu_custom_call.1} parent=1 // pred_check
      _
    $region43: #{tpu_custom_call.1} parent=1 // pred_check_branch
      %78 = sbr.rel (0) target = $region45
    $region44: #{tpu_custom_call.1} parent=1 // pred_region
      %79 = dma.done [#allocation9], 256
    $region45: #{tpu_custom_call.1} parent=1 // pred_fallthru
      _
    %v81 = vld [vmem:[#allocation2] sm:$0xf]
    %v82 = vld [vmem:[#allocation5] sm:$0xf]
    %v83 = vld [vmem:[#allocation5 + $0x4] sm:$0xf]
    %v84 = vld [vmem:[%s2] sm:$0x1]
    %v86 = vlaneseq
    %v87 = vshrl.u32 %v86, 7
    %v88 = vsub.s32 0, %v87
    %v89 = vrot.slane %v84, %v88
    %v93 = vunpack.c.l.b16 %v82
    %v94 = vunpack.c.l.b16 %v83
    %v95 = vpack.c.b16 %v94, %v93
    %vm97 = vcmask 130048
    %v99 = vsel %vm97, %v81, 0
    %101 = vmatprep.subr.bf16.mxu0 0
    %102 = vmatpush1.bf16.msra.mxu0 0
    %103 = vmatprep.subr.bf16.mxu0 0
    %104 = vmatpush1.bf16.msra.mxu0 0
    %105 = vmatprep.subr.bf16.mxu0 0
    %106 = vmatpush1.bf16.msra.mxu0 0
    %107 = vmatprep.subr.bf16.mxu0 0
    %108 = vmatpush1.bf16.msra.mxu0 0
    %109 = vmatprep.subr.bf16.mxu0 0
    %110 = vmatpush1.bf16.msra.mxu0 0
    %111 = vmatprep.subr.bf16.mxu0 0
    %112 = vmatpush1.bf16.msra.mxu0 0
    %113 = vmatprep.subr.bf16.mxu0 0
    %114 = vmatpush1.bf16.msra.mxu0 0
    %115 = vmatprep.subr.bf16.mxu0 0
    %116 = vmatpush1.bf16.msra.mxu0 %v95
    %117 = vmatprep.subr.bf16.mxu0 0
    %118 = vmatpush2.bf16.msra.mxu0 0
    %119 = vmatprep.subr.bf16.mxu0 0
    %120 = vmatpush2.bf16.msra.mxu0 0
    %121 = vmatprep.subr.bf16.mxu0 0
    %122 = vmatpush2.bf16.msra.mxu0 0
    %123 = vmatprep.subr.bf16.mxu0 0
    %124 = vmatpush2.bf16.msra.mxu0 0
    %125 = vmatprep.subr.bf16.mxu0 0
    %126 = vmatpush2.bf16.msra.mxu0 0
    %127 = vmatprep.subr.bf16.mxu0 0
    %128 = vmatpush2.bf16.msra.mxu0 0
    %129 = vmatprep.subr.bf16.mxu0 0
    %130 = vmatpush2.bf16.msra.mxu0 0
    %131 = vmatprep.subr.bf16.mxu0 0
    %132 = vmatpush2.bf16.msra.mxu0 0
    %133 = vmatprep.mubr.bf16.mxu0 0
    %134 = vmatmul.mubr.bf16.gmra.mxu0 %v99
    %v135 = vpop.f32.mrf.mxu0
    %v136 = vadd.f32 %v89, %v135
    %v137 = vpop.f32.mrf.mxu0
    %v138 = vpop.f32.mrf.mxu0
    %v139 = vpop.f32.mrf.mxu0
    %140 = vdwg.mxu0
    %v141 = vmax.f32 %v136, 0.0
    %v142 = vpack.c.bf16 %v141, %v141
    %v143 = vld [vmem:[#allocation7] sm:$0xf]
    %v144 = vld [vmem:[#allocation7 + $0x4] sm:$0xf]
    %v145 = vld [vmem:[#allocation7 + $0x8] sm:$0xf]
    %v146 = vld [vmem:[#allocation7 + $0xc] sm:$0xf]
    %v147 = vld [vmem:[%s4] sm:$0x1]
    %v149 = vlaneseq
    %v150 = vshrl.u32 %v149, 7
    %v151 = vsub.s32 0, %v150
    %v152 = vrot.slane %v147, %v151
    %v158 = vunpack.c.l.b16 %v143
    %v159 = vunpack.c.l.b16 %v144
    %v160 = vunpack.c.l.b16 %v145
    %v161 = vunpack.c.l.b16 %v146
    %v162 = vpack.c.b16 %v159, %v158
    %v163 = vpack.c.b16 %v161, %v160
    %vm166 = vcmask 261120
    %v168 = vsel %vm166, %v142, 0
    %170 = vmatprep.subr.bf16.mxu0 0
    %171 = vmatpush1.bf16.msra.mxu0 0
    %172 = vmatprep.subr.bf16.mxu0 0
    %173 = vmatpush1.bf16.msra.mxu0 0
    %174 = vmatprep.subr.bf16.mxu0 0
    %175 = vmatpush1.bf16.msra.mxu0 0
    %176 = vmatprep.subr.bf16.mxu0 0
    %177 = vmatpush1.bf16.msra.mxu0 0
    %178 = vmatprep.subr.bf16.mxu0 0
    %179 = vmatpush1.bf16.msra.mxu0 0
    %180 = vmatprep.subr.bf16.mxu0 0
    %181 = vmatpush1.bf16.msra.mxu0 0
    %182 = vmatprep.subr.bf16.mxu0 0
    %183 = vmatpush1.bf16.msra.mxu0 %v163
    %184 = vmatprep.subr.bf16.mxu0 0
    %185 = vmatpush1.bf16.msra.mxu0 %v162
    %186 = vmatprep.subr.bf16.mxu0 0
    %187 = vmatpush2.bf16.msra.mxu0 0
    %188 = vmatprep.subr.bf16.mxu0 0
    %189 = vmatpush2.bf16.msra.mxu0 0
    %190 = vmatprep.subr.bf16.mxu0 0
    %191 = vmatpush2.bf16.msra.mxu0 0
    %192 = vmatprep.subr.bf16.mxu0 0
    %193 = vmatpush2.bf16.msra.mxu0 0
    %194 = vmatprep.subr.bf16.mxu0 0
    %195 = vmatpush2.bf16.msra.mxu0 0
    %196 = vmatprep.subr.bf16.mxu0 0
    %197 = vmatpush2.bf16.msra.mxu0 0
    %198 = vmatprep.subr.bf16.mxu0 0
    %199 = vmatpush2.bf16.msra.mxu0 0
    %200 = vmatprep.subr.bf16.mxu0 0
    %201 = vmatpush2.bf16.msra.mxu0 0
    %202 = vmatprep.mubr.bf16.mxu0 0
    %203 = vmatmul.mubr.bf16.gmra.mxu0 %v168
    %v204 = vpop.f32.mrf.mxu0
    %v205 = vadd.f32 %v152, %v204
    %v206 = vpop.f32.mrf.mxu0
    %v207 = vpop.f32.mrf.mxu0
    %v208 = vpop.f32.mrf.mxu0
    %209 = vdwg.mxu0
    %v210 = vmax.f32 %v205, 0.0
    %v211 = vpack.c.bf16 %v210, %v210
    %v212 = vld [vmem:[#allocation8] sm:$0xf]
    %v213 = vld [vmem:[#allocation8 + $0x4] sm:$0xf]
    %v214 = vld [vmem:[#allocation8 + $0x8] sm:$0xf]
    %v215 = vld [vmem:[#allocation8 + $0xc] sm:$0xf]
    %v216 = vld [vmem:[%s6] sm:$0x1]
    %v218 = vlaneseq
    %v219 = vshrl.u32 %v218, 7
    %v220 = vsub.s32 0, %v219
    %v221 = vrot.slane %v216, %v220
    %v227 = vunpack.c.l.b16 %v212
    %v228 = vunpack.c.l.b16 %v213
    %v229 = vunpack.c.l.b16 %v214
    %v230 = vunpack.c.l.b16 %v215
    %v231 = vpack.c.b16 %v228, %v227
    %v232 = vpack.c.b16 %v230, %v229
    %v236 = vsel %vm166, %v211, 0
    %238 = vmatprep.subr.bf16.mxu0 0
    %239 = vmatpush1.bf16.msra.mxu0 0
    %240 = vmatprep.subr.bf16.mxu0 0
    %241 = vmatpush1.bf16.msra.mxu0 0
    %242 = vmatprep.subr.bf16.mxu0 0
    %243 = vmatpush1.bf16.msra.mxu0 0
    %244 = vmatprep.subr.bf16.mxu0 0
    %245 = vmatpush1.bf16.msra.mxu0 0
    %246 = vmatprep.subr.bf16.mxu0 0
    %247 = vmatpush1.bf16.msra.mxu0 0
    %248 = vmatprep.subr.bf16.mxu0 0
    %249 = vmatpush1.bf16.msra.mxu0 0
    %250 = vmatprep.subr.bf16.mxu0 0
    %251 = vmatpush1.bf16.msra.mxu0 %v232
    %252 = vmatprep.subr.bf16.mxu0 0
    %253 = vmatpush1.bf16.msra.mxu0 %v231
    %254 = vmatprep.subr.bf16.mxu0 0
    %255 = vmatpush2.bf16.msra.mxu0 0
    %256 = vmatprep.subr.bf16.mxu0 0
    %257 = vmatpush2.bf16.msra.mxu0 0
    %258 = vmatprep.subr.bf16.mxu0 0
    %259 = vmatpush2.bf16.msra.mxu0 0
    %260 = vmatprep.subr.bf16.mxu0 0
    %261 = vmatpush2.bf16.msra.mxu0 0
    %262 = vmatprep.subr.bf16.mxu0 0
    %263 = vmatpush2.bf16.msra.mxu0 0
    %264 = vmatprep.subr.bf16.mxu0 0
    %265 = vmatpush2.bf16.msra.mxu0 0
    %266 = vmatprep.subr.bf16.mxu0 0
    %267 = vmatpush2.bf16.msra.mxu0 0
    %268 = vmatprep.subr.bf16.mxu0 0
    %269 = vmatpush2.bf16.msra.mxu0 0
    %270 = vmatprep.mubr.bf16.mxu0 0
    %271 = vmatmul.mubr.bf16.gmra.mxu0 %v236
    %v272 = vpop.f32.mrf.mxu0
    %v273 = vadd.f32 %v221, %v272
    %v274 = vpop.f32.mrf.mxu0
    %v275 = vpop.f32.mrf.mxu0
    %v276 = vpop.f32.mrf.mxu0
    %277 = vdwg.mxu0
    %v278 = vlaneseq
    %v279 = vand.u32 %v278, 127
    %vm280 = vcmp.ge.s32.totalorder %v279, 64
    %v281 = vmul.f32 %v273, 1.442695
    %v282 = vpow.pop %v281
    %v283 = vsel %vm280, %v282, %v273
    %v284 = vpack.c.bf16 %v283, %v283
    %285 = vst [vmem:[#allocation10] sm:$0xf] %v284
    // Predicated region
    $region46: #{tpu_custom_call.1} parent=1 // pred_check
      _
    $region47: #{tpu_custom_call.1} parent=1 // pred_check_branch
      %287 = sbr.rel (0) target = $region49
    $region48: #{tpu_custom_call.1} parent=1 // pred_region
      %s289 = ssub.s32 64, 64
      %290 = vsyncadd [#allocation4], %s289
      %s292 = sshll.u32 [#allocation10], 4
      %s293 = int_to_ptr.vmem [resolvable:$true] %s292
      %295 = dma.vmem_to_hbm [thread:$0]  %s293, 64, %s7, [#allocation4]
    $region49: #{tpu_custom_call.1} parent=1 // pred_fallthru
      _
    // Predicated region
    $region50: #{tpu_custom_call.1} parent=1 // pred_check
      _
    $region51: #{tpu_custom_call.1} parent=1 // pred_check_branch
      %297 = sbr.rel (0) target = $region53
    $region52: #{tpu_custom_call.1} parent=1 // pred_region
      %298 = dma.done [#allocation4], 64
    $region53: #{tpu_custom_call.1} parent=1 // pred_fallthru
      _
    %299 = vsyncpa [#allocation3], 1
    %300 = vsyncpa [#allocation6], 1
    %301 = vsyncpa [#allocation9], 1
    %302 = vsyncpa [#allocation4], 1

</llo_original>
